<compile_context>
chip_gen: v7x
topology: tpu7x:2x2x1
jax: 0.10.0
libtpu: 0.0.40
codegen_flags: <defaults>
</compile_context>

<pallas_src>
import jax
import jax.numpy as jnp
from jax.experimental import pallas as pl
from jax.experimental.pallas import tpu as pltpu


def _mean_pool_kernel(x_ref, m_ref, inv_ref, o_ref):
    # x_ref  : (TB, TS, TH)  activations block
    # m_ref  : (TB, TS, 1)   mask block, already cast to x.dtype
    # inv_ref: (TB, 1) f32   precomputed 1 / clamp(sum(mask), 1e-9)
    # o_ref  : (TB, TH) f32  output block; resident across the s axis, used
    #                        directly as the accumulator.
    s = pl.program_id(2)

    @pl.when(s == 0)
    def _init():
        o_ref[...] = jnp.zeros_like(o_ref)

    # Mask is 0/1, so the product in x.dtype is exact; accumulate in float32.
    o_ref[...] += jnp.sum(x_ref[...] * m_ref[...], axis=1, dtype=jnp.float32)

    @pl.when(s == pl.num_programs(2) - 1)
    def _finalize():
        o_ref[...] = o_ref[...] * inv_ref[...]


def _desc_multiples(n, unit):
    """Tile sizes that evenly divide n and are multiples of `unit`, in
    descending order; n itself (full dim, always legal under the (8, 128)
    rule) is always included as the final fallback."""
    cands = {t for t in range(unit, n + 1, unit) if n % t == 0}
    cands.add(n)
    return sorted(cands, reverse=True)


def _choose_tiles(B, S, H, x_itemsize, budget_bytes):
    """Pick (TB, TS, TH): maximize TH first (contiguous / lane axis), then TS,
    then TB, subject to one x block fitting within budget_bytes."""
    th_cands = _desc_multiples(H, 128)
    ts_cands = _desc_multiples(S, 8)
    # TB a multiple of 8 (or full B) keeps the (B, 1) inv input's sublane dim
    # legal under the (8, 128) tiling rule.
    tb_cands = _desc_multiples(B, 8)
    for th in th_cands:
        for ts in ts_cands:
            for tb in tb_cands:
                if tb * ts * th * x_itemsize <= budget_bytes:
                    return tb, ts, th, tb_cands, th_cands
    # Nothing fits the budget (e.g. huge non-tileable S/H): fall back to the
    # smallest legal tiles; the caller sizes vmem_limit_bytes from the actual
    # blocks so this stays budget-aware rather than silently oversubscribing.
    return tb_cands[-1], ts_cands[-1], th_cands[-1], tb_cands, th_cands


def _ensure_parallel_blocks(B, H, tb, th, tb_cands, th_cands):
    """v7x has 2 TensorCores and shards only 'parallel' grid axes; make sure
    the parallel part of the grid has >= 2 blocks (cheap on v5e/v6e)."""
    if (B // tb) * (H // th) >= 2:
        return tb, th
    smaller_tb = [c for c in tb_cands if c < tb]
    if smaller_tb:
        return smaller_tb[0], th
    smaller_th = [c for c in th_cands if c < th]
    if smaller_th:
        return tb, smaller_th[0]
    return tb, th


def mean_pooling(last_hidden_state, attention_masks, *,
                 vmem_budget_bytes=12 * 1024 * 1024, x_buffers=2):
    """Masked mean pooling over the sequence axis.

    last_hidden_state: [B, S, H] (float32 or bfloat16)
    attention_masks:   [B, S]    (0/1 mask, int or float)
    returns:           [B, H] float32

    x_buffers: pipeline depth for the activation stream (2 = default double
    buffering; sweep 3 on v7x where per-block DMA is short).
    """
    B, S, H = last_hidden_state.shape
    assert attention_masks.shape == (B, S)
    x = last_hidden_state
    x_dt = x.dtype
    itemsize = jnp.dtype(x_dt).itemsize

    # Hoisted denominator: one tiny XLA reduction over the cheap mask array.
    cnt = jnp.sum(attention_masks.astype(jnp.float32), axis=1, keepdims=True)
    inv = 1.0 / jnp.maximum(cnt, 1e-9)                       # (B, 1) float32

    # Pre-shape / pre-cast the mask so the in-kernel broadcast is a lane splat.
    m = attention_masks.astype(x_dt)[:, :, None]             # (B, S, 1)

    # Pad S up to a multiple of 8 if needed (zero mask rows contribute nothing
    # to either the sum or the count) so the sequence axis is tileable.
    if S % 8 != 0:
        pad = (-S) % 8
        x = jnp.pad(x, ((0, 0), (0, pad), (0, 0)))
        m = jnp.pad(m, ((0, 0), (0, pad), (0, 0)))
        S = S + pad

    tb, ts, th, tb_cands, th_cands = _choose_tiles(B, S, H, itemsize,
                                                   vmem_budget_bytes)
    tb, th = _ensure_parallel_blocks(B, H, tb, th, tb_cands, th_cands)
    grid = (B // tb, H // th, S // ts)        # reduction (sequence) axis last

    # Explicit scoped-VMEM sizing from the actual blocks.
    x_blk = tb * ts * th * itemsize
    m_blk = tb * ts * 1 * itemsize
    i_blk = tb * 1 * 4
    o_blk = tb * th * 4
    needed = x_buffers * x_blk + 2 * (m_blk + i_blk + o_blk)
    vmem_limit = int(max(needed + (4 << 20), 32 << 20))

    x_spec_kwargs = {}
    if x_buffers > 2:
        # Deeper pipelining for the activation stream (e.g. Buffered(3) on v7x).
        x_spec_kwargs["pipeline_mode"] = pl.Buffered(x_buffers)

    return pl.pallas_call(
        _mean_pool_kernel,
        out_shape=jax.ShapeDtypeStruct((B, H), jnp.float32),
        grid_spec=pltpu.PrefetchScalarGridSpec(
            num_scalar_prefetch=0,
            grid=grid,
            in_specs=[
                pl.BlockSpec((tb, ts, th), lambda b, h, s: (b, s, h),
                             **x_spec_kwargs),
                pl.BlockSpec((tb, ts, 1), lambda b, h, s: (b, s, 0)),
                pl.BlockSpec((tb, 1), lambda b, h, s: (b, 0)),
            ],
            out_specs=pl.BlockSpec((tb, th), lambda b, h, s: (b, h)),
        ),
        compiler_params=pltpu.CompilerParams(
            dimension_semantics=("parallel", "parallel", "arbitrary"),
            vmem_limit_bytes=vmem_limit,
        ),
    )(x, m, inv)


def _reference(last_hidden_state, attention_masks):
    m = attention_masks[..., None].astype(jnp.float32)
    x = last_hidden_state.astype(jnp.float32)
    s = jnp.sum(x * m, axis=1)
    d = jnp.maximum(jnp.sum(m, axis=1), 1e-9)
    return s / d


if __name__ == "__main__":
    key = jax.random.PRNGKey(0)

    # Test 1: small shapes (full-array blocks, grid = (1, 1, 1)).
    k1, k2, key = jax.random.split(key, 3)
    B, S, H = 2, 8, 32
    x = jax.random.normal(k1, (B, S, H), dtype=jnp.float32)
    m = (jax.random.uniform(k2, (B, S)) > 0.3).astype(jnp.int32)
    out = jax.block_until_ready(mean_pooling(x, m))
    assert out.shape == (B, H) and out.dtype == jnp.float32
    assert jnp.allclose(out, _reference(x, m), atol=1e-5, rtol=1e-5), "t1 mismatch"

    # Test 2: batch, hidden, and sequence tiling all active (grid = (2, 2, 32))
    # by shrinking the per-buffer VMEM budget.
    k1, k2, key = jax.random.split(key, 3)
    B, S, H = 16, 256, 256
    x = jax.random.normal(k1, (B, S, H), dtype=jnp.float32)
    m = (jax.random.uniform(k2, (B, S)) > 0.3).astype(jnp.int32)
    out = jax.block_until_ready(mean_pooling(x, m, vmem_budget_bytes=48 * 1024))
    assert jnp.allclose(out, _reference(x, m), atol=1e-5, rtol=1e-4), "t2 mismatch"

    # Test 3: bf16 activations (multiply in bf16, accumulate in f32) with the
    # default budget; exercises the >=2-parallel-blocks split on the hidden axis.
    k1, k2, key = jax.random.split(key, 3)
    B, S, H = 8, 128, 256
    x = jax.random.normal(k1, (B, S, H), dtype=jnp.float32).astype(jnp.bfloat16)
    m = (jax.random.uniform(k2, (B, S)) > 0.3).astype(jnp.int32)
    out = jax.block_until_ready(mean_pooling(x, m))
    assert jnp.allclose(out, _reference(x, m), atol=2e-2, rtol=2e-2), "t3 mismatch"

    # Test 4: sequence length not a multiple of 8 (exercises the zero-pad path).
    k1, k2, key = jax.random.split(key, 3)
    B, S, H = 2, 10, 32
    x = jax.random.normal(k1, (B, S, H), dtype=jnp.float32)
    m = (jax.random.uniform(k2, (B, S)) > 0.3).astype(jnp.int32)
    out = jax.block_until_ready(mean_pooling(x, m))
    assert jnp.allclose(out, _reference(x, m), atol=1e-5, rtol=1e-5), "t4 mismatch"

    print("KERNEL_OK")
</pallas_src>

<mosaic_0001>
module attributes {stable_mosaic.version = 11 : i64} {
  func.func @_mean_pool_kernel(%arg0: i32, %arg1: i32, %arg2: i32, %arg3: memref<2x8x32xf32, #tpu.memory_space<vmem>>, %arg4: memref<2x8x1xf32, #tpu.memory_space<vmem>>, %arg5: memref<2x1xf32, #tpu.memory_space<vmem>>, %arg6: memref<2x32xf32, #tpu.memory_space<vmem>>) attributes {dimension_semantics = [#tpu.dimension_semantics<parallel>, #tpu.dimension_semantics<parallel>, #tpu.dimension_semantics<arbitrary>], iteration_bounds = array<i64: 1, 1, 1>, scalar_prefetch = 0 : i64, scratch_operands = 0 : i64, tpu.core_type = #tpu.core_type<tc>, window_params = [{transform_indices = @transform_0, window_bounds = array<i64: 2, 8, 32>}, {transform_indices = @transform_1, window_bounds = array<i64: 2, 8, 1>}, {transform_indices = @transform_2, window_bounds = array<i64: 2, 1>}, {transform_indices = @transform_3, window_bounds = array<i64: 2, 32>}]} {
    %c0_i32 = arith.constant 0 : i32
    %0 = arith.cmpi eq, %arg2, %c0_i32 : i32
    %1 = arith.extui %0 : i1 to i32
    %c0_i32_0 = arith.constant 0 : i32
    %2 = arith.cmpi ne, %1, %c0_i32_0 : i32
    scf.if %2 {
      %cst_12 = arith.constant 0.000000e+00 : f32
      %14 = vector.broadcast %cst_12 : f32 to vector<2x32xf32>
      %c0_13 = arith.constant 0 : index
      %c0_14 = arith.constant 0 : index
      %15 = vector.load %arg6[%c0_13, %c0_14] : memref<2x32xf32, #tpu.memory_space<vmem>>, vector<2x32xf32>
      tpu.vector_store %arg6[%c0_13, %c0_14], %14 {strides = array<i32>} : memref<2x32xf32, #tpu.memory_space<vmem>>, vector<2x32xf32>,
    } else {
    }
    %c0 = arith.constant 0 : index
    %c0_1 = arith.constant 0 : index
    %3 = vector.load %arg6[%c0, %c0_1] : memref<2x32xf32, #tpu.memory_space<vmem>>, vector<2x32xf32>
    %c0_2 = arith.constant 0 : index
    %c0_3 = arith.constant 0 : index
    %c0_4 = arith.constant 0 : index
    %4 = vector.load %arg3[%c0_2, %c0_3, %c0_4] : memref<2x8x32xf32, #tpu.memory_space<vmem>>, vector<2x8x32xf32>
    %c0_5 = arith.constant 0 : index
    %c0_6 = arith.constant 0 : index
    %c0_7 = arith.constant 0 : index
    %5 = vector.load %arg4[%c0_5, %c0_6, %c0_7] : memref<2x8x1xf32, #tpu.memory_space<vmem>>, vector<2x8x1xf32>
    %6 = vector.broadcast %5 : vector<2x8x1xf32> to vector<2x8x32xf32>
    %7 = arith.mulf %4, %6 : vector<2x8x32xf32>
    %cst = arith.constant dense<0.000000e+00> : vector<2x32xf32>
    %8 = vector.multi_reduction <add>, %7, %cst [1] : vector<2x8x32xf32> to vector<2x32xf32>
    %9 = arith.addf %3, %8 : vector<2x32xf32>
    %c0_8 = arith.constant 0 : index
    %c0_9 = arith.constant 0 : index
    %10 = vector.load %arg6[%c0_8, %c0_9] : memref<2x32xf32, #tpu.memory_space<vmem>>, vector<2x32xf32>
    tpu.vector_store %arg6[%c0_8, %c0_9], %9 {strides = array<i32>} : memref<2x32xf32, #tpu.memory_space<vmem>>, vector<2x32xf32>,
    %c0_i32_10 = arith.constant 0 : i32
    %11 = arith.cmpi eq, %arg2, %c0_i32_10 : i32
    %12 = arith.extui %11 : i1 to i32
    %c0_i32_11 = arith.constant 0 : i32
    %13 = arith.cmpi ne, %12, %c0_i32_11 : i32
    scf.if %13 {
      %c0_12 = arith.constant 0 : index
      %c0_13 = arith.constant 0 : index
      %14 = vector.load %arg6[%c0_12, %c0_13] : memref<2x32xf32, #tpu.memory_space<vmem>>, vector<2x32xf32>
      %c0_14 = arith.constant 0 : index
      %c0_15 = arith.constant 0 : index
      %15 = vector.load %arg5[%c0_14, %c0_15] : memref<2x1xf32, #tpu.memory_space<vmem>>, vector<2x1xf32>
      %16 = vector.broadcast %15 : vector<2x1xf32> to vector<2x32xf32>
      %17 = arith.mulf %14, %16 : vector<2x32xf32>
      %c0_16 = arith.constant 0 : index
      %c0_17 = arith.constant 0 : index
      %18 = vector.load %arg6[%c0_16, %c0_17] : memref<2x32xf32, #tpu.memory_space<vmem>>, vector<2x32xf32>
      tpu.vector_store %arg6[%c0_16, %c0_17], %17 {strides = array<i32>} : memref<2x32xf32, #tpu.memory_space<vmem>>, vector<2x32xf32>,
    } else {
    }
    return
  }
  func.func @transform_0(%arg0: i32, %arg1: i32, %arg2: i32) -> (i32, i32, i32) {
    %c0_i32 = arith.constant 0 : i32
    return %arg0, %arg2, %arg1 : i32, i32, i32
  }
  func.func @transform_1(%arg0: i32, %arg1: i32, %arg2: i32) -> (i32, i32, i32) {
    %c0_i32 = arith.constant 0 : i32
    %c0_i32_0 = arith.constant 0 : i32
    return %arg0, %arg2, %c0_i32 : i32, i32, i32
  }
  func.func @transform_2(%arg0: i32, %arg1: i32, %arg2: i32) -> (i32, i32) {
    %c0_i32 = arith.constant 0 : i32
    %c0_i32_0 = arith.constant 0 : i32
    return %arg0, %c0_i32 : i32, i32
  }
  func.func @transform_3(%arg0: i32, %arg1: i32, %arg2: i32) -> (i32, i32) {
    %c0_i32 = arith.constant 0 : i32
    return %arg0, %arg1 : i32, i32
  }
}

</mosaic_0001>

<llo_original>
// kernel: tpu_custom_call.1
$region0: #{tpu_custom_call.1}
  #allocation0 [shape = 'u32[]', space=smem, size = 0x4, offset = 0x4, fixed_abs, tag = 'smem constant byte address 0x4 - core index']
  #allocation1 [shape = 'u32[144,128]{1,0:T(1,128)}', space=vmem, size = 0x12000, scoped, tag = 'internal scratch']
  %s0 = inlined_call_operand.vmem [shape: f32[2,8,32], index: 0, kind: input, shape index: {}]
  %s1 = inlined_call_operand.vmem [shape: f32[2,8,1], index: 1, kind: input, shape index: {}]
  %s2 = inlined_call_operand.vmem [shape: f32[2,1], index: 2, kind: input, shape index: {}]
  %s3 = inlined_call_operand.hbm [shape: f32[2,32], index: 3, kind: output, shape index: {}]
  %s4 = sld [smem:[#allocation0]]
  $region30: #{tpu_custom_call.1} parent=0
    _
  %s6 = ssub.s32 1, %s4
  %s7 = scalar_select 0, %s6, %s4
  $region1: #{tpu_custom_call.1} parent=0
    #allocation2 [shape = 'u8[1024]{0}', space=vmem, size = 0x400, scoped, tag = 'output window, operand 0, single buffered']
    #allocation3 [shape = 's32[1]{0}', space=sflag, size = 0x4, scoped, tag = 'scoped memory for tpu_custom_call.1']
    %8 = vsyncpa [#allocation3], 0
    // Predicated region
    $region2: #{tpu_custom_call.1} parent=1 // pred_check
      _
    $region3: #{tpu_custom_call.1} parent=1 // pred_check_branch
      %10 = sbr.rel (0) target = $region5
    $region4: #{tpu_custom_call.1} parent=1 // pred_region
      _
    $region5: #{tpu_custom_call.1} parent=1 // pred_fallthru
      _
    // Predicated region
    $region6: #{tpu_custom_call.1} parent=1 // pred_check
      _
    $region7: #{tpu_custom_call.1} parent=1 // pred_check_branch
      %12 = sbr.rel (0) target = $region9
    $region8: #{tpu_custom_call.1} parent=1 // pred_region
      _
    $region9: #{tpu_custom_call.1} parent=1 // pred_fallthru
      _
    // Predicated region
    $region10: #{tpu_custom_call.1} parent=1 // pred_check
      _
    $region11: #{tpu_custom_call.1} parent=1 // pred_check_branch
      %14 = sbr.rel (0) target = $region13
    $region12: #{tpu_custom_call.1} parent=1 // pred_region
      _
    $region13: #{tpu_custom_call.1} parent=1 // pred_fallthru
      _
    %p15 = scmp.eq.s32.totalorder 0, 0
    // Predicated region
    $region14: #{tpu_custom_call.1} parent=1 // pred_check
      %p16 = pneg %p15
    $region15: #{tpu_custom_call.1} parent=1 // pred_check_branch
      %18 = sbr.rel (%p16) target = $region17
    $region16: #{tpu_custom_call.1} parent=1 // pred_region
      %vm19 = vcmask 254976
      %20 = vst.msk [vmem:[#allocation2] sm:$0x3] %vm19, 0.0
    $region17: #{tpu_custom_call.1} parent=1 // pred_fallthru
      _
    %v21 = vld [vmem:[#allocation2] sm:$0x3]
    %v22 = vld [vmem:[%s0] sm:$0xff]
    %v23 = vld [vmem:[%s0 + $0x8] sm:$0xff]
    %v24 = vld [vmem:[%s1] sm:$0xff]
    %v25 = vld [vmem:[%s1 + $0x8] sm:$0xff]
    %27 = vset.pattern.permute.xlu0 0
    %28 = vperm.xlu0 %27, %v24
    %v29 = vpop.permute.xlu0 %28
    %32 = vset.pattern.permute.xlu0 0
    %33 = vperm.xlu0 %32, %v25
    %v34 = vpop.permute.xlu0 %33
    %v36 = vmul.f32 %v22, %v29
    %v37 = vmul.f32 %v23, %v34
    %vm38 = vcmask 261120
    %v39 = vsel %vm38, %v36, 0.0
    %v40 = vrot.slane %v39, 4
    %v41 = vadd.f32 %v39, %v40
    %v42 = vrot.slane %v41, 2
    %v43 = vadd.f32 %v41, %v42
    %v44 = vrot.slane %v43, 1
    %v45 = vadd.f32 %v43, %v44
    %v46 = vsel %vm38, %v37, 0.0
    %v47 = vrot.slane %v46, 4
    %v48 = vadd.f32 %v46, %v47
    %v49 = vrot.slane %v48, 2
    %v50 = vadd.f32 %v48, %v49
    %v51 = vrot.slane %v50, 1
    %v52 = vadd.f32 %v50, %v51
    %vm55 = vcmask 1041409
    %v56 = vsel %vm55, %v52, %v45
    %v58 = vadd.f32 %v21, %v56
    %vm59 = vcmask 254976
    %60 = vst.msk [vmem:[#allocation2] sm:$0x3] %vm59, %v58
    // Predicated region
    $region18: #{tpu_custom_call.1} parent=1 // pred_check
      %p61 = pneg %p15
    $region19: #{tpu_custom_call.1} parent=1 // pred_check_branch
      %63 = sbr.rel (%p61) target = $region21
    $region20: #{tpu_custom_call.1} parent=1 // pred_region
      %v64 = vld [vmem:[#allocation2] sm:$0x3]
      %v65 = vld [vmem:[%s2] sm:$0x3]
      %67 = vset.pattern.permute.xlu0 0
      %68 = vperm.xlu0 %67, %v65
      %v69 = vpop.permute.xlu0 %68
      %v71 = vmul.f32 %v64, %v69
      %72 = vst.msk [vmem:[#allocation2] sm:$0x3] %vm59, %v71
    $region21: #{tpu_custom_call.1} parent=1 // pred_fallthru
      _
    // Predicated region
    $region22: #{tpu_custom_call.1} parent=1 // pred_check
      _
    $region23: #{tpu_custom_call.1} parent=1 // pred_check_branch
      %74 = sbr.rel (0) target = $region25
    $region24: #{tpu_custom_call.1} parent=1 // pred_region
      %s76 = ssub.s32 32, 32
      %77 = vsyncadd [#allocation3], %s76
      %s79 = sshll.u32 [#allocation2], 4
      %s80 = int_to_ptr.vmem [resolvable:$true] %s79
      %82 = dma.vmem_to_hbm [thread:$0]  %s80, 32, %s3, [#allocation3]
    $region25: #{tpu_custom_call.1} parent=1 // pred_fallthru
      _
    // Predicated region
    $region26: #{tpu_custom_call.1} parent=1 // pred_check
      _
    $region27: #{tpu_custom_call.1} parent=1 // pred_check_branch
      %84 = sbr.rel (0) target = $region29
    $region28: #{tpu_custom_call.1} parent=1 // pred_region
      %85 = dma.done [#allocation3], 32
    $region29: #{tpu_custom_call.1} parent=1 // pred_fallthru
      _
    %86 = vsyncpa [#allocation3], 1

</llo_original>
